<compile_context>
chip_gen: v5e
topology: v5e:2x2
jax: 0.10.0
libtpu: 0.0.40
codegen_flags: <defaults>
</compile_context>

<pallas_src>
import functools

import jax
import jax.numpy as jnp
from jax import lax
from jax.experimental import pallas as pl
from jax.experimental.pallas import tpu as pltpu


def _round_up(x, m):
    return (x + m - 1) // m * m


def _attention_kernel(x_ref, w_ref, b_ref, o_ref, *, P):
    # x_ref: (N, dim) f32      one batch element's rows
    # w_ref: (dim, 4*P) bf16   fused [Q*scale | K | V | V·Wproj], zero-padded lanes
    # b_ref: (1, P) f32        zero-padded proj bias
    # o_ref: (N, P)            lane-dense output (padding stripped in the wrapper)
    x = x_ref[...]

    # Single fused lane-dense MXU matmul: bf16 operands, f32 accumulation.
    qkv = jnp.dot(x.astype(jnp.bfloat16), w_ref[...],
                  preferred_element_type=jnp.float32)            # (N, 4P) f32

    q = qkv[:, 0:P]              # scale already folded into the Q weights
    k = qkv[:, P:2 * P]
    v = qkv[:, 2 * P:3 * P]      # kept for the residual (v.squeeze(1) + x)
    vp = qkv[:, 3 * P:4 * P]     # x @ (Wv @ Wproj)

    # q @ k^T without materializing a transposed k tile (contract feature dim).
    s = lax.dot_general(q.astype(jnp.bfloat16), k.astype(jnp.bfloat16),
                        dimension_numbers=(((1,), (1,)), ((), ())),
                        preferred_element_type=jnp.float32)      # (N, N) f32

    # Numerically-stable softmax in f32; exact reciprocal on the idle EUP.
    s = s - jnp.max(s, axis=-1, keepdims=True)
    p = jnp.exp(s)
    p = p * pl.reciprocal(jnp.sum(p, axis=-1, keepdims=True), approx=False)

    # attn_drop is p=0.0 -> identity.
    # Fused epilogue: (attn @ v) @ Wproj == attn @ (x @ (Wv·Wproj)).
    out = jnp.dot(p.astype(jnp.bfloat16), vp.astype(jnp.bfloat16),
                  preferred_element_type=jnp.float32)            # (N, P) f32

    # proj_drop identity; residual in f32; bias added once.
    o_ref[...] = (v + out + b_ref[...]).astype(o_ref.dtype)


def prepare_params(w_qkv, w_proj, b_proj, *, scale, lane=128,
                   mxu_dtype=jnp.bfloat16):
    """One-time weight prep: fold `scale` into Q, fuse [Q|K|V|V·Wproj] along the
    lane axis, zero-pad in_dim to a multiple of 128 (lane-dense stores), and
    store the fused matmul weight in bf16 for the MXU."""
    dim, in_dim = w_qkv.shape[1], w_qkv.shape[2]
    P = _round_up(in_dim, lane)
    pad = P - in_dim

    wq = w_qkv[0] * scale
    wk = w_qkv[1]
    wv = w_qkv[2]
    wvp = w_qkv[2] @ w_proj                                  # (dim, in_dim)

    def _pad(w):
        return jnp.pad(w, ((0, 0), (0, pad))) if pad else w

    w_fused = jnp.concatenate([_pad(wq), _pad(wk), _pad(wv), _pad(wvp)],
                              axis=1)                         # (dim, 4P)
    b_p = jnp.pad(b_proj, ((0, 0), (0, pad)))                 # (1, P), stays f32
    return w_fused.astype(mxu_dtype), b_p.astype(jnp.float32), P


def attention_forward(x, w_fused, b_proj_p, *, in_dim):
    """x: (B, N, dim); prepared weights from prepare_params. Returns (B, N, in_dim)."""
    B, N, dim = x.shape
    P = b_proj_p.shape[1]
    BN = B * N
    x2d = x.reshape(BN, dim)

    kernel = functools.partial(_attention_kernel, P=P)

    # Advisory cost estimate (helps XLA schedule around a launch-bound call).
    flops = int(B * (2 * N * dim * 4 * P + 4 * N * N * P))
    transcendentals = int(B * N * N + B * N)
    bytes_accessed = int(x2d.size * 4 + w_fused.size * 2
                         + b_proj_p.size * 4 + BN * P * 4)

    out2d = pl.pallas_call(
        kernel,
        out_shape=jax.ShapeDtypeStruct((BN, P), x.dtype),
        grid=(B,),
        in_specs=[
            pl.BlockSpec((N, dim), lambda b: (b, 0)),
            pl.BlockSpec((dim, 4 * P), lambda b: (0, 0)),
            pl.BlockSpec((1, P), lambda b: (0, 0)),
        ],
        out_specs=pl.BlockSpec((N, P), lambda b: (b, 0)),
        compiler_params=pltpu.CompilerParams(
            dimension_semantics=("parallel",),
        ),
        cost_estimate=pl.CostEstimate(
            flops=flops,
            transcendentals=transcendentals,
            bytes_accessed=bytes_accessed,
        ),
    )(x2d, w_fused, b_proj_p)

    # Strip the lane padding added for the kernel.
    return out2d.reshape(B, N, P)[:, :, :in_dim]


def reference_forward(x, w_qkv, w_proj, b_proj, *, scale):
    """Pure-JAX f32 replica of the PyTorch forward (num_heads=1)."""
    q = jnp.einsum("bnd,de->bne", x, w_qkv[0])
    k = jnp.einsum("bnd,de->bne", x, w_qkv[1])
    v = jnp.einsum("bnd,de->bne", x, w_qkv[2])
    attn = jax.nn.softmax((q * scale) @ jnp.swapaxes(k, -2, -1), axis=-1)
    out = attn @ v
    out = out @ w_proj + b_proj[0]
    return v + out


if __name__ == "__main__":
    # Module config (token_transformer style): num_heads=1, qkv_bias=False,
    # qk_scale=None -> scale = (dim // num_heads) ** -0.5.
    B, N, dim, in_dim = 2, 16, 32, 64
    num_heads = 1
    scale = float((dim // num_heads) ** (-0.5))

    key = jax.random.PRNGKey(0)
    kx, kqkv, kproj, kb = jax.random.split(key, 4)

    x = jax.random.normal(kx, (B, N, dim), dtype=jnp.float32)
    # Deterministic synthetic parameters (nn.Linear(dim, 3*in_dim, bias=False)
    # and nn.Linear(in_dim, in_dim) with bias), stored pre-transposed for x @ W.
    w_qkv = jax.random.normal(kqkv, (3, dim, in_dim), dtype=jnp.float32) * 0.05
    w_proj = jax.random.normal(kproj, (in_dim, in_dim), dtype=jnp.float32) * 0.05
    b_proj = jax.random.normal(kb, (1, in_dim), dtype=jnp.float32) * 0.05

    # One-time weight preparation (scale fold, QKV + V·Wproj fusion, 128-lane
    # padding, bf16 MXU storage).
    w_fused, b_proj_p, P = prepare_params(w_qkv, w_proj, b_proj, scale=scale)

    out = attention_forward(x, w_fused, b_proj_p, in_dim=in_dim)
    out = jax.block_until_ready(out)

    ref = reference_forward(x, w_qkv, w_proj, b_proj, scale=scale)
    assert out.shape == (B, N, in_dim)
    # Tolerance covers bf16 MXU operands and the (p@v)@Wproj -> p@(v@Wproj)
    # reassociation; accumulation, softmax and residual are f32.
    assert jnp.allclose(out, ref, atol=2e-2, rtol=2e-2), "mismatch vs. JAX reference"

    print("KERNEL_OK")
</pallas_src>

<mosaic_0001>
module attributes {stable_mosaic.version = 11 : i64} {
  func.func @_attention_kernel(%arg0: i32, %arg1: memref<16x32xf32, #tpu.memory_space<vmem>>, %arg2: memref<32x512xbf16, #tpu.memory_space<vmem>>, %arg3: memref<1x128xf32, #tpu.memory_space<vmem>>, %arg4: memref<16x128xf32, #tpu.memory_space<vmem>>) attributes {dimension_semantics = [#tpu.dimension_semantics<parallel>], iteration_bounds = array<i64: 2>, scalar_prefetch = 0 : i64, scratch_operands = 0 : i64, tpu.core_type = #tpu.core_type<tc>, window_params = [{transform_indices = @transform_0, window_bounds = array<i64: 16, 32>}, {pipeline_mode = #tpu.pipeline_mode<synchronous>, transform_indices = @transform_1, window_bounds = array<i64: 32, 512>}, {pipeline_mode = #tpu.pipeline_mode<synchronous>, transform_indices = @transform_2, window_bounds = array<i64: 1, 128>}, {transform_indices = @transform_3, window_bounds = array<i64: 16, 128>}]} {
    %c0 = arith.constant 0 : index
    %c0_0 = arith.constant 0 : index
    %0 = vector.load %arg1[%c0, %c0_0] : memref<16x32xf32, #tpu.memory_space<vmem>>, vector<16x32xf32>
    %1 = arith.truncf %0 : vector<16x32xf32> to vector<16x32xbf16>
    %c0_1 = arith.constant 0 : index
    %c0_2 = arith.constant 0 : index
    %2 = vector.load %arg2[%c0_1, %c0_2] : memref<32x512xbf16, #tpu.memory_space<vmem>>, vector<32x512xbf16>
    %cst = arith.constant dense<0.000000e+00> : vector<16x512xf32>
    %3 = tpu.matmul %1, %2, %cst {dimension_numbers = #tpu.dot_dimension_numbers<[1], [0], [0], [1], [0, 0, 1, 1], [], []>} : vector<16x32xbf16>, vector<32x512xbf16>, vector<16x512xf32> -> vector<16x512xf32>
    %4 = vector.extract_strided_slice %3 {offsets = [0, 0], sizes = [16, 128], strides = [1, 1]} : vector<16x512xf32> to vector<16x128xf32>
    %5 = vector.extract_strided_slice %3 {offsets = [0, 128], sizes = [16, 128], strides = [1, 1]} : vector<16x512xf32> to vector<16x128xf32>
    %6 = vector.extract_strided_slice %3 {offsets = [0, 256], sizes = [16, 128], strides = [1, 1]} : vector<16x512xf32> to vector<16x128xf32>
    %7 = vector.extract_strided_slice %3 {offsets = [0, 384], sizes = [16, 128], strides = [1, 1]} : vector<16x512xf32> to vector<16x128xf32>
    %8 = arith.truncf %4 : vector<16x128xf32> to vector<16x128xbf16>
    %9 = arith.truncf %5 : vector<16x128xf32> to vector<16x128xbf16>
    %cst_3 = arith.constant dense<0.000000e+00> : vector<16x16xf32>
    %10 = tpu.matmul %8, %9, %cst_3 {dimension_numbers = #tpu.dot_dimension_numbers<[1], [1], [0], [0], [0, 0, 1, 0], [], []>} : vector<16x128xbf16>, vector<16x128xbf16>, vector<16x16xf32> -> vector<16x16xf32>
    %cst_4 = arith.constant dense<0xFF800000> : vector<16xf32>
    %11 = vector.multi_reduction <maximumf>, %10, %cst_4 [1] : vector<16x16xf32> to vector<16xf32>
    %12 = vector.shape_cast %11 : vector<16xf32> to vector<16x1xf32>
    %13 = vector.broadcast %12 : vector<16x1xf32> to vector<16x16xf32>
    %14 = arith.subf %10, %13 : vector<16x16xf32>
    %15 = math.exp %14 : vector<16x16xf32>
    %cst_5 = arith.constant dense<0.000000e+00> : vector<16xf32>
    %16 = vector.multi_reduction <add>, %15, %cst_5 [1] : vector<16x16xf32> to vector<16xf32>
    %17 = vector.shape_cast %16 : vector<16xf32> to vector<16x1xf32>
    %18 = tpu.reciprocal %17 : vector<16x1xf32> -> vector<16x1xf32>
    %19 = vector.broadcast %18 : vector<16x1xf32> to vector<16x16xf32>
    %20 = arith.mulf %15, %19 : vector<16x16xf32>
    %21 = arith.truncf %20 : vector<16x16xf32> to vector<16x16xbf16>
    %22 = arith.truncf %7 : vector<16x128xf32> to vector<16x128xbf16>
    %cst_6 = arith.constant dense<0.000000e+00> : vector<16x128xf32>
    %23 = tpu.matmul %21, %22, %cst_6 {dimension_numbers = #tpu.dot_dimension_numbers<[1], [0], [0], [1], [0, 0, 1, 1], [], []>} : vector<16x16xbf16>, vector<16x128xbf16>, vector<16x128xf32> -> vector<16x128xf32>
    %24 = arith.addf %6, %23 : vector<16x128xf32>
    %c0_7 = arith.constant 0 : index
    %c0_8 = arith.constant 0 : index
    %25 = vector.load %arg3[%c0_7, %c0_8] : memref<1x128xf32, #tpu.memory_space<vmem>>, vector<1x128xf32>
    %26 = vector.broadcast %25 : vector<1x128xf32> to vector<16x128xf32>
    %27 = arith.addf %24, %26 : vector<16x128xf32>
    %c0_9 = arith.constant 0 : index
    %c0_10 = arith.constant 0 : index
    %28 = vector.load %arg4[%c0_9, %c0_10] : memref<16x128xf32, #tpu.memory_space<vmem>>, vector<16x128xf32>
    tpu.vector_store %arg4[%c0_9, %c0_10], %27 {strides = array<i32>} : memref<16x128xf32, #tpu.memory_space<vmem>>, vector<16x128xf32>,
    return
  }
  func.func @transform_0(%arg0: i32) -> (i32, i32) {
    %c0_i32 = arith.constant 0 : i32
    %c0_i32_0 = arith.constant 0 : i32
    return %arg0, %c0_i32 : i32, i32
  }
  func.func @transform_1(%arg0: i32) -> (i32, i32) {
    %c0_i32 = arith.constant 0 : i32
    %c0_i32_0 = arith.constant 0 : i32
    %c0_i32_1 = arith.constant 0 : i32
    return %c0_i32, %c0_i32_0 : i32, i32
  }
  func.func @transform_2(%arg0: i32) -> (i32, i32) {
    %c0_i32 = arith.constant 0 : i32
    %c0_i32_0 = arith.constant 0 : i32
    %c0_i32_1 = arith.constant 0 : i32
    return %c0_i32, %c0_i32_0 : i32, i32
  }
  func.func @transform_3(%arg0: i32) -> (i32, i32) {
    %c0_i32 = arith.constant 0 : i32
    %c0_i32_0 = arith.constant 0 : i32
    return %arg0, %c0_i32 : i32, i32
  }
}

</mosaic_0001>

<llo_original>
// kernel: tpu_custom_call.1
$region0: #{tpu_custom_call.1}
  #allocation0 [shape = 'u32[]', space=smem, size = 0x4, offset = 0x4, fixed_abs, tag = 'smem constant byte address 0x4 - core index']
  #allocation1 [shape = 'u32[72,128]{1,0:T(1,128)}', space=vmem, size = 0x9000, scoped, tag = 'internal scratch']
  %s0 = inlined_call_operand.hbm [shape: f32[32,32], index: 0, kind: input, shape index: {}]
  %s1 = inlined_call_operand.hbm [shape: bf16[32,512], index: 1, kind: input, shape index: {}]
  %s2 = inlined_call_operand.vmem [shape: f32[1,128], index: 2, kind: input, shape index: {}]
  %s3 = inlined_call_operand.hbm [shape: f32[32,128], index: 3, kind: output, shape index: {}]
  %s4 = sld [smem:[#allocation0]]
  $region53: #{tpu_custom_call.1} parent=0
    _
  %s6 = ssub.s32 1, %s4
  %s7 = scalar_select 0, %s6, %s4
  $region1: #{tpu_custom_call.1} parent=0
    #allocation2 [shape = 'u8[16384]{0}', space=vmem, size = 0x4000, scoped, tag = 'input window, operand 0']
    #allocation3 [shape = 's32[2]{0}', space=sflag, size = 0x8, scoped, tag = 'scoped memory for tpu_custom_call.1']
    #allocation4 [shape = 's32[2]{0}', space=sflag, size = 0x8, scoped, tag = 'scoped memory for tpu_custom_call.1']
    #allocation5 [shape = 'u8[32768]{0}', space=vmem, size = 0x8000, scoped, tag = 'input window, operand 1, single buffered']
    #allocation6 [shape = 's32[1]{0}', space=sflag, size = 0x4, scoped, tag = 'scoped memory for tpu_custom_call.1']
    #allocation7 [shape = 'u8[16384]{0}', space=vmem, size = 0x4000, scoped, tag = 'output window, operand 0']
    %8 = vsyncpa [#allocation3], 0
    %s9 = scalar_lea.sflag [#allocation3], 1
    %10 = vsyncpa %s9, 0
    %11 = vsyncpa [#allocation6], 0
    %12 = vsyncpa [#allocation4], 0
    %s13 = scalar_lea.sflag [#allocation4], 1
    %14 = vsyncpa %s13, 0
    loop: start=0, step=1, limit=4
    $region2: #{tpu_custom_call.1} parent=1 // loop_pre_header
      _
    $region3: #{tpu_custom_call.1} parent=1 // loop_header
      %s16 = sphi 0, %s20
      %p17 = scmp.ge.s32.totalorder %s16, 4
      %s26 = sphi 0, %s28
      %s29 = sphi 0, %s26
      %s30 = sphi 0, %s29
      %s46 = sphi 0, %s30
      %s50 = sphi 0, %s50
      %s52 = sphi 0, %s50
      %s53 = sphi 0, %s52
      %s67 = sphi 0, %s53
      %s71 = sphi 0, %s71
      %s73 = sphi 0, %s71
      %s74 = sphi 0, %s73
      %s88 = sphi 0, %s74
      %s94 = sphi 0, %s96
      %s97 = sphi 0, %s94
      %s98 = sphi 0, %s97
      %s114 = sphi 0, %s98
    $region4: #{tpu_custom_call.1} parent=1 // loop_header_branch
      %19 = sbr.rel (%p17) target = $region8
    $region5: #{tpu_custom_call.1} parent=1 // loop_body
      %s21 = ssub.s32 %s16, 1
      %s22 = ssub.s32 %s16, 2
      %s23 = sadd.s32 %s16, 1
      %s24 = ssub.s32 %s16, %s23
      %p25 = scmp.eq.s32.totalorder %s24, 0
      %s27 = sadd.s32 %s26, 1
      %s28 = scalar_select %p25, %s26, %s27
      %p31 = pneg %p25
      %p32 = scmp.eq.s32.totalorder %s16, 1
      %p33 = por %p31, %p32
      %p34 = scmp.ne.s32.totalorder %s26, %s29
      %p35 = scmp.eq.s32.totalorder %s16, 0
      %p36 = por %p34, %p35
      %p37 = scmp.ne.s32.totalorder %s26, %s29
      %p38 = scmp.eq.s32.totalorder %s21, 1
      %p39 = por %p37, %p38
      %p40 = scmp.ne.s32.totalorder %s29, %s30
      %p41 = scmp.eq.s32.totalorder %s21, 0
      %p42 = por %p40, %p41
      %p43 = scmp.ne.s32.totalorder %s29, %s30
      %p44 = scmp.eq.s32.totalorder %s22, 1
      %p45 = por %p43, %p44
      %p47 = scmp.ne.s32.totalorder %s30, %s46
      %p48 = scmp.eq.s32.totalorder %s22, 0
      %p49 = por %p47, %p48
      %s51 = sadd.s32 %s50, 1
      %p54 = scmp.eq.s32.totalorder %s16, 1
      %p55 = scmp.ne.s32.totalorder %s50, %s52
      %p56 = scmp.eq.s32.totalorder %s16, 0
      %p57 = por %p55, %p56
      %p58 = scmp.ne.s32.totalorder %s50, %s52
      %p59 = scmp.eq.s32.totalorder %s21, 1
      %p60 = por %p58, %p59
      %p61 = scmp.ne.s32.totalorder %s52, %s53
      %p62 = scmp.eq.s32.totalorder %s21, 0
      %p63 = por %p61, %p62
      %p64 = scmp.ne.s32.totalorder %s52, %s53
      %p65 = scmp.eq.s32.totalorder %s22, 1
      %p66 = por %p64, %p65
      %p68 = scmp.ne.s32.totalorder %s53, %s67
      %p69 = scmp.eq.s32.totalorder %s22, 0
      %p70 = por %p68, %p69
      %s72 = sadd.s32 %s71, 1
      %p75 = scmp.eq.s32.totalorder %s16, 1
      %p76 = scmp.ne.s32.totalorder %s71, %s73
      %p77 = scmp.eq.s32.totalorder %s16, 0
      %p78 = por %p76, %p77
      %p79 = scmp.ne.s32.totalorder %s71, %s73
      %p80 = scmp.eq.s32.totalorder %s21, 1
      %p81 = por %p79, %p80
      %p82 = scmp.ne.s32.totalorder %s73, %s74
      %p83 = scmp.eq.s32.totalorder %s21, 0
      %p84 = por %p82, %p83
      %p85 = scmp.ne.s32.totalorder %s73, %s74
      %p86 = scmp.eq.s32.totalorder %s22, 1
      %p87 = por %p85, %p86
      %p89 = scmp.ne.s32.totalorder %s74, %s88
      %p90 = scmp.eq.s32.totalorder %s22, 0
      %p91 = por %p89, %p90
      %s92 = ssub.s32 %s16, %s23
      %p93 = scmp.eq.s32.totalorder %s92, 0
      %s95 = sadd.s32 %s94, 1
      %s96 = scalar_select %p93, %s94, %s95
      %p99 = pneg %p93
      %p100 = scmp.eq.s32.totalorder %s16, 1
      %p101 = por %p99, %p100
      %p102 = scmp.ne.s32.totalorder %s94, %s97
      %p103 = scmp.eq.s32.totalorder %s16, 0
      %p104 = por %p102, %p103
      %p105 = scmp.ne.s32.totalorder %s94, %s97
      %p106 = scmp.eq.s32.totalorder %s21, 1
      %p107 = por %p105, %p106
      %p108 = scmp.ne.s32.totalorder %s97, %s98
      %p109 = scmp.eq.s32.totalorder %s21, 0
      %p110 = por %p108, %p109
      %p111 = scmp.ne.s32.totalorder %s97, %s98
      %p112 = scmp.eq.s32.totalorder %s22, 1
      %p113 = por %p111, %p112
      %p115 = scmp.ne.s32.totalorder %s98, %s114
      %p116 = scmp.eq.s32.totalorder %s22, 0
      %p117 = por %p115, %p116
      %p118 = scmp.le.s32.totalorder 1, %s16
      %p119 = scmp.lt.s32.totalorder %s16, 3
      %p120 = pnand %p118, %p119
      %p121 = pneg %p120
      // Predicated region
      $region9: #{tpu_custom_call.1} parent=5 // pred_check
        _
      $region10: #{tpu_custom_call.1} parent=5 // pred_check_branch
        %123 = sbr.rel (%p120) target = $region12
      $region11: #{tpu_custom_call.1} parent=5 // pred_region
        %s124 = ssub.s32 %s16, 1
        // Predicated region
        $region13: #{tpu_custom_call.1} parent=11 // pred_check
          %p125 = pneg %p63
        $region14: #{tpu_custom_call.1} parent=11 // pred_check_branch
          %127 = sbr.rel (%p125) target = $region16
        $region15: #{tpu_custom_call.1} parent=11 // pred_region
          %129 = vsyncadd [#allocation6], 0
          %s130 = sshll.u32 %s1, 4
          %s131 = int_to_ptr.hbm [resolvable:$true] %s130
          %s132 = sshll.u32 [#allocation5], 4
          %s133 = int_to_ptr.vmem [resolvable:$true] %s132
          %138 = dma.hbm_to_vmem [thread:$0]  %s131, 1024, %s133, [#allocation6], 256, 256, 16
        $region16: #{tpu_custom_call.1} parent=11 // pred_fallthru
          _
        // Predicated region
        $region17: #{tpu_custom_call.1} parent=11 // pred_check
          %p139 = pneg %p84
        $region18: #{tpu_custom_call.1} parent=11 // pred_check_branch
          %141 = sbr.rel (%p139) target = $region20
        $region19: #{tpu_custom_call.1} parent=11 // pred_region
          _
        $region20: #{tpu_custom_call.1} parent=11 // pred_fallthru
          _
      $region12: #{tpu_custom_call.1} parent=5 // pred_fallthru
        _
      %p142 = scmp.lt.s32.totalorder %s16, 2
      // Predicated region
      $region21: #{tpu_custom_call.1} parent=5 // pred_check
        %p143 = pneg %p142
      $region22: #{tpu_custom_call.1} parent=5 // pred_check_branch
        %145 = sbr.rel (%p143) target = $region24
      $region23: #{tpu_custom_call.1} parent=5 // pred_region
        // Predicated region
        $region25: #{tpu_custom_call.1} parent=23 // pred_check
          %p146 = pneg %p36
        $region26: #{tpu_custom_call.1} parent=23 // pred_check_branch
          %148 = sbr.rel (%p146) target = $region28
        $region27: #{tpu_custom_call.1} parent=23 // pred_region
          %s149 = sand.u32 %s26, 1
          %s150 = scalar_lea.sflag [#allocation3], %s149
          %s151 = sand.u32 %s26, 1
          %s152 = smul.addr %s151, 16
          %s153 = scalar_lea.vmem [#allocation2], %s152
          %s154 = smul.u32 2, %s16
          %156 = vsyncadd %s150, 0
          %s157 = smul.addr %s154, 8
          %s158 = scalar_lea.hbm %s0, %s157
          %s159 = sshll.u32 %s158, 4
          %s160 = int_to_ptr.hbm [resolvable:$true] %s159
          %s161 = sshll.u32 %s153, 4
          %s162 = int_to_ptr.vmem [resolvable:$true] %s161
          %167 = dma.hbm_to_vmem [thread:$0]  %s160, 256, %s162, %s150, 128, 128, 8
        $region28: #{tpu_custom_call.1} parent=23 // pred_fallthru
          _
      $region24: #{tpu_custom_call.1} parent=5 // pred_fallthru
        _
      %p168 = scmp.le.s32.totalorder 1, %s16
      %p169 = scmp.lt.s32.totalorder %s16, 3
      %p170 = pnand %p168, %p169
      %p171 = pneg %p170
      // Predicated region
      $region29: #{tpu_custom_call.1} parent=5 // pred_check
        _
      $region30: #{tpu_custom_call.1} parent=5 // pred_check_branch
        %173 = sbr.rel (%p170) target = $region32
      $region31: #{tpu_custom_call.1} parent=5 // pred_region
        %s174 = ssub.s32 %s16, 1
        %s175 = sand.u32 %s29, 1
        %s176 = scalar_lea.sflag [#allocation3], %s175
        %s177 = sand.u32 %s29, 1
        %s178 = smul.addr %s177, 16
        %s179 = scalar_lea.vmem [#allocation2], %s178
        // Predicated region
        $region33: #{tpu_custom_call.1} parent=31 // pred_check
          %p180 = pneg %p42
        $region34: #{tpu_custom_call.1} parent=31 // pred_check_branch
          %182 = sbr.rel (%p180) target = $region36
        $region35: #{tpu_custom_call.1} parent=31 // pred_region
          %184 = dma.done %s176, 256
        $region36: #{tpu_custom_call.1} parent=31 // pred_fallthru
          _
        // Predicated region
        $region37: #{tpu_custom_call.1} parent=31 // pred_check
          %p185 = pneg %p63
        $region38: #{tpu_custom_call.1} parent=31 // pred_check_branch
          %187 = sbr.rel (%p185) target = $region40
        $region39: #{tpu_custom_call.1} parent=31 // pred_region
          %189 = dma.done [#allocation6], 1024
        $region40: #{tpu_custom_call.1} parent=31 // pred_fallthru
          _
        %s190 = sand.u32 %s29, 1
        %s191 = scalar_lea.sflag [#allocation3], %s190
        %s192 = sand.u32 %s29, 1
        %s193 = smul.addr %s192, 16
        %s194 = scalar_lea.vmem [#allocation2], %s193
        %p195 = pneg %p42
        %p196 = pneg %p39
        %p197 = pneg %p63
        %p198 = pneg %p60
        %p199 = pneg %p84
        %p200 = pneg %p81
        %p201 = pneg %p110
        %p202 = pneg %p107
        %s203 = sand.u32 %s97, 1
        %s204 = scalar_lea.sflag [#allocation4], %s203
        %s205 = sand.u32 %s97, 1
        %s206 = smul.addr %s205, 16
        %s207 = scalar_lea.vmem [#allocation7], %s206
        %s208 = smul.u32 2, %s21
        %s209 = smul.u32 2, %s21
        %v211 = vld [vmem:[%s179] sm:$0xff]
        %v212 = vld [vmem:[%s179 + $0x8] sm:$0xff]
        %v213 = vpack.c.bf16 %v212, %v211
        %v214 = vld [vmem:[#allocation5] sm:$0xff]
        %v215 = vld [vmem:[#allocation5 + $0x8] sm:$0xff]
        %v216 = vld [vmem:[#allocation5 + $0x10] sm:$0xff]
        %v217 = vld [vmem:[#allocation5 + $0x18] sm:$0xff]
        %v218 = vld [vmem:[#allocation5 + $0x20] sm:$0xff]
        %v219 = vld [vmem:[#allocation5 + $0x28] sm:$0xff]
        %v220 = vld [vmem:[#allocation5 + $0x30] sm:$0xff]
        %v221 = vld [vmem:[#allocation5 + $0x38] sm:$0xff]
        %v230 = vunpack.c.l.b16 %v214
        %v231 = vunpack.c.h.b16 %v214
        %v232 = vunpack.c.l.b16 %v215
        %v233 = vunpack.c.h.b16 %v215
        %v234 = vunpack.c.l.b16 %v216
        %v235 = vunpack.c.h.b16 %v216
        %v236 = vunpack.c.l.b16 %v217
        %v237 = vunpack.c.h.b16 %v217
        %v238 = vunpack.c.l.b16 %v218
        %v239 = vunpack.c.h.b16 %v218
        %v240 = vunpack.c.l.b16 %v219
        %v241 = vunpack.c.h.b16 %v219
        %v242 = vunpack.c.l.b16 %v220
        %v243 = vunpack.c.h.b16 %v220
        %v244 = vunpack.c.l.b16 %v221
        %v245 = vunpack.c.h.b16 %v221
        %v246 = vpack.c.b16 %v234, %v230
        %v247 = vpack.c.b16 %v235, %v231
        %v248 = vpack.c.b16 %v236, %v232
        %v249 = vpack.c.b16 %v237, %v233
        %v250 = vpack.c.b16 %v242, %v238
        %v251 = vpack.c.b16 %v243, %v239
        %v252 = vpack.c.b16 %v244, %v240
        %v253 = vpack.c.b16 %v245, %v241
        %vm262 = vcmask 261120
        %v264 = vsel %vm262, %v213, 0
        %266 = vmatpush.bf16.msra.mxu0 0
        %267 = vmatpush.bf16.msra.mxu0 0
        %268 = vmatpush.bf16.msra.mxu0 0
        %269 = vmatpush.bf16.msra.mxu0 0
        %270 = vmatpush.bf16.msra.mxu0 0
        %271 = vmatpush.bf16.msra.mxu0 0
        %272 = vmatpush.bf16.msra.mxu0 %v250
        %273 = vmatpush.bf16.msra.mxu0 %v246
        %274 = vmatmul.bf16.gmra.mxu0 %v264
        %v275 = vpop.f32.mrf.mxu0
        %v276 = vadd.f32 0.0, %v275
        %v277 = vpop.f32.mrf.mxu0
        %v278 = vadd.f32 0.0, %v277
        %279 = vdwg.mxu0
        %280 = vmatpush.bf16.msra.mxu0 0
        %281 = vmatpush.bf16.msra.mxu0 0
        %282 = vmatpush.bf16.msra.mxu0 0
        %283 = vmatpush.bf16.msra.mxu0 0
        %284 = vmatpush.bf16.msra.mxu0 0
        %285 = vmatpush.bf16.msra.mxu0 0
        %286 = vmatpush.bf16.msra.mxu0 %v251
        %287 = vmatpush.bf16.msra.mxu0 %v247
        %288 = vmatmul.bf16.gmra.mxu0 %v264
        %v289 = vpop.f32.mrf.mxu0
        %v290 = vadd.f32 0.0, %v289
        %v291 = vpop.f32.mrf.mxu0
        %v292 = vadd.f32 0.0, %v291
        %293 = vdwg.mxu0
        %294 = vmatpush.bf16.msra.mxu0 0
        %295 = vmatpush.bf16.msra.mxu0 0
        %296 = vmatpush.bf16.msra.mxu0 0
        %297 = vmatpush.bf16.msra.mxu0 0
        %298 = vmatpush.bf16.msra.mxu0 0
        %299 = vmatpush.bf16.msra.mxu0 0
        %300 = vmatpush.bf16.msra.mxu0 %v252
        %301 = vmatpush.bf16.msra.mxu0 %v248
        %302 = vmatmul.bf16.gmra.mxu0 %v264
        %v303 = vpop.f32.mrf.mxu0
        %v304 = vadd.f32 0.0, %v303
        %v305 = vpop.f32.mrf.mxu0
        %v306 = vadd.f32 0.0, %v305
        %307 = vdwg.mxu0
        %308 = vmatpush.bf16.msra.mxu0 0
        %309 = vmatpush.bf16.msra.mxu0 0
        %310 = vmatpush.bf16.msra.mxu0 0
        %311 = vmatpush.bf16.msra.mxu0 0
        %312 = vmatpush.bf16.msra.mxu0 0
        %313 = vmatpush.bf16.msra.mxu0 0
        %314 = vmatpush.bf16.msra.mxu0 %v253
        %315 = vmatpush.bf16.msra.mxu0 %v249
        %316 = vmatmul.bf16.gmra.mxu0 %v264
        %v317 = vpop.f32.mrf.mxu0
        %v318 = vadd.f32 0.0, %v317
        %v319 = vpop.f32.mrf.mxu0
        %v320 = vadd.f32 0.0, %v319
        %321 = vdwg.mxu0
        %v322 = vpack.c.bf16 %v278, %v276
        %v323 = vpack.c.bf16 %v292, %v290
        %324 = vmatpush.bf16.xpose.msra.mxu0 0
        %325 = vmatpush.bf16.xpose.msra.mxu0 0
        %326 = vmatpush.bf16.xpose.msra.mxu0 0
        %327 = vmatpush.bf16.xpose.msra.mxu0 0
        %328 = vmatpush.bf16.xpose.msra.mxu0 0
        %329 = vmatpush.bf16.xpose.msra.mxu0 0
        %330 = vmatpush.bf16.xpose.msra.mxu0 0
        %331 = vmatpush.bf16.xpose.msra.mxu0 %v323
        %332 = vmatmul.bf16.gmra.mxu0 %v322
        %v333 = vpop.f32.mrf.mxu0
        %v334 = vadd.f32 0.0, %v333
        %v335 = vpop.f32.mrf.mxu0
        %v336 = vadd.f32 0.0, %v335
        %337 = vdwg.mxu0
        %vm338 = vcmask 130048
        %v339 = vsel %vm338, %v334, -inf
        %340 = vmax.xlane.f32.xlu0 %v339
        %v341 = vpop.xlane.xlu0 %340
        %v342 = vsel %vm338, %v336, -inf
        %343 = vmax.xlane.f32.xlu0 %v342
        %v344 = vpop.xlane.xlu0 %343
        %v345 = vsub.f32 %v334, %v341
        %v346 = vsub.f32 %v336, %v344
        %v347 = vmul.f32 %v345, 1.442695
        %v348 = vpow.pop %v347
        %v349 = vmul.f32 %v346, 1.442695
        %v350 = vpow.pop %v349
        %v351 = vsel %vm338, %v348, 0.0
        %352 = vadd.xlane.f32.xlu0 %v351
        %v353 = vpop.xlane.xlu0 %352
        %v354 = vsel %vm338, %v350, 0.0
        %355 = vadd.xlane.f32.xlu0 %v354
        %v356 = vpop.xlane.xlu0 %355
        %v357 = vrcp.pop %v353
        %v358 = vmul.f32 %v353, %v357
        %v359 = vsub.f32 1.0, %v358
        %v360 = vmul.f32 %v357, %v359
        %v361 = vadd.f32 %v357, %v360
        %vm362 = vweird.f32 %v353
        %vm363 = vweird.f32 %v357
        %vm364 = vmor %vm362, %vm363
        %v365 = vsel %vm364, %v357, %v361
        %v366 = vand.u32 2147483647, %v353
        %vm367 = vcmp.eq.f32.partialorder %v366, 8.507059e+37
        %v368 = vand.u32 %v353, 2147483648
        %v369 = vor.u32 1.1754944e-38, %v368
        %v370 = vsel %vm367, %v369, %v365
        %v371 = vrcp.pop %v356
        %v372 = vmul.f32 %v356, %v371
        %v373 = vsub.f32 1.0, %v372
        %v374 = vmul.f32 %v371, %v373
        %v375 = vadd.f32 %v371, %v374
        %vm376 = vweird.f32 %v356
        %vm377 = vweird.f32 %v371
        %vm378 = vmor %vm376, %vm377
        %v379 = vsel %vm378, %v371, %v375
        %v380 = vand.u32 2147483647, %v356
        %vm381 = vcmp.eq.f32.partialorder %v380, 8.507059e+37
        %v382 = vand.u32 %v356, 2147483648
        %v383 = vor.u32 1.1754944e-38, %v382
        %v384 = vsel %vm381, %v383, %v379
        %v385 = vmul.f32 %v348, %v370
        %v386 = vmul.f32 %v350, %v384
        %v387 = vpack.c.bf16 %v386, %v385
        %v388 = vpack.c.bf16 %v320, %v318
        %v390 = vsel %vm338, %v387, 0
        %392 = vmatpush.bf16.msra.mxu0 0
        %393 = vmatpush.bf16.msra.mxu0 0
        %394 = vmatpush.bf16.msra.mxu0 0
        %395 = vmatpush.bf16.msra.mxu0 0
        %396 = vmatpush.bf16.msra.mxu0 0
        %397 = vmatpush.bf16.msra.mxu0 0
        %398 = vmatpush.bf16.msra.mxu0 0
        %399 = vmatpush.bf16.msra.mxu0 %v388
        %400 = vmatmul.bf16.gmra.mxu0 %v390
        %v401 = vpop.f32.mrf.mxu0
        %v402 = vadd.f32 0.0, %v401
        %v403 = vpop.f32.mrf.mxu0
        %v404 = vadd.f32 0.0, %v403
        %405 = vdwg.mxu0
        %v406 = vadd.f32 %v304, %v402
        %v407 = vadd.f32 %v306, %v404
        %v408 = vld [vmem:[%s2] sm:$0x1]
        %v410 = vperm.slane %v408, 0
        %v412 = vadd.f32 %v406, %v410
        %v413 = vadd.f32 %v407, %v410
        %414 = vst [vmem:[%s207] sm:$0xff] %v412
        %415 = vst [vmem:[%s207 + $0x8] sm:$0xff] %v413
        %s416 = sand.u32 %s97, 1
        %s417 = scalar_lea.sflag [#allocation4], %s416
        %s418 = sand.u32 %s97, 1
        %s419 = smul.addr %s418, 16
        %s420 = scalar_lea.vmem [#allocation7], %s419
        // Predicated region
        $region41: #{tpu_custom_call.1} parent=31 // pred_check
          %p421 = pneg %p107
        $region42: #{tpu_custom_call.1} parent=31 // pred_check_branch
          %423 = sbr.rel (%p421) target = $region44
        $region43: #{tpu_custom_call.1} parent=31 // pred_region
          %s424 = smul.u32 2, %s21
          %426 = vsyncadd %s417, 0
          %s427 = smul.addr %s424, 8
          %s428 = scalar_lea.hbm %s3, %s427
          %s429 = sshll.u32 %s420, 4
          %s430 = int_to_ptr.vmem [resolvable:$true] %s429
          %s431 = sshll.u32 %s428, 4
          %s432 = int_to_ptr.hbm [resolvable:$true] %s431
          %437 = dma.vmem_to_hbm [thread:$0]  %s430, 256, %s432, %s417, 128, 128, 8
        $region44: #{tpu_custom_call.1} parent=31 // pred_fallthru
          _
      $region32: #{tpu_custom_call.1} parent=5 // pred_fallthru
        _
      %p438 = scmp.le.s32.totalorder 2, %s16
      // Predicated region
      $region45: #{tpu_custom_call.1} parent=5 // pred_check
        %p439 = pneg %p438
      $region46: #{tpu_custom_call.1} parent=5 // pred_check_branch
        %441 = sbr.rel (%p439) target = $region48
      $region47: #{tpu_custom_call.1} parent=5 // pred_region
        %s442 = ssub.s32 %s16, 2
        // Predicated region
        $region49: #{tpu_custom_call.1} parent=47 // pred_check
          %p443 = pneg %p113
        $region50: #{tpu_custom_call.1} parent=47 // pred_check_branch
          %445 = sbr.rel (%p443) target = $region52
        $region51: #{tpu_custom_call.1} parent=47 // pred_region
          %s446 = sand.u32 %s98, 1
          %s447 = scalar_lea.sflag [#allocation4], %s446
          %s448 = sand.u32 %s98, 1
          %s449 = smul.addr %s448, 16
          %s450 = scalar_lea.vmem [#allocation7], %s449
          %452 = dma.done %s447, 256
        $region52: #{tpu_custom_call.1} parent=47 // pred_fallthru
          _
      $region48: #{tpu_custom_call.1} parent=5 // pred_fallthru
        _
    $region6: #{tpu_custom_call.1} parent=1 // loop_footer
      %s20 = sadd.s32 1, %s16
    $region7: #{tpu_custom_call.1} parent=1 // loop_footer_branch
      %15 = sbr.rel target = $region3
    $region8: #{tpu_custom_call.1} parent=1 // loop_exit
      _
    %453 = vsyncpa [#allocation3], 1
    %s454 = scalar_lea.sflag [#allocation3], 1
    %455 = vsyncpa %s454, 1
    %456 = vsyncpa [#allocation6], 1
    %457 = vsyncpa [#allocation4], 1
    %s458 = scalar_lea.sflag [#allocation4], 1
    %459 = vsyncpa %s458, 1

</llo_original>
